<compile_context>
chip_gen: v7x
topology: tpu7x:2x2x1
jax: 0.10.0
libtpu: 0.0.40
codegen_flags: <defaults>
</compile_context>

<pallas_src>
import functools

import jax
import jax.numpy as jnp
import numpy as np
from jax.experimental import pallas as pl
from jax.experimental.pallas import tpu as pltpu

NEG_SLOPE = 0.01   # torch.nn.LeakyReLU() default
NUM_SLOTS = 3      # hard-coded `.expand(-1, 3, -1)` in the PyTorch forward

_VMEM_BUDGET = 48 << 20   # double-buffered working-set budget (safe on v7x's 64 MiB VMEM)
_TM_MAX = 512
_TN_MAX = 512


def _round_up(x, m):
    return (x + m - 1) // m * m


def _vmem_bytes(tm, tn, in_dim):
    """Estimate of the double-buffered VMEM working set for one layer's kernel."""
    x_b = tm * in_dim * 4           # f32 activations
    g_b = tm * NUM_SLOTS * 4        # int32 genres
    i_b = tm * 4                    # f32 inv_denom
    w_b = in_dim * tn * 2           # bf16 weight tile
    o_b = tm * tn * 4               # f32 output tile
    acc_b = tm * tn * 4             # f32 scratch accumulator (single-buffered)
    return 2 * (x_b + g_b + i_b + w_b + o_b) + acc_b


def _choose_tn(in_dim, out_p, tm):
    """Largest N-tile (multiple of 128, divisor of out_p, <= _TN_MAX) fitting the budget."""
    cands = [t for t in range(128, min(out_p, _TN_MAX) + 1, 128) if out_p % t == 0]
    for tn in reversed(cands):
        if _vmem_bytes(tm, tn, in_dim) <= _VMEM_BUDGET:
            return tn
    return cands[0]


def _choose_tm(B, layer_dims):
    """Single batch-tile size (multiple of 8 sublanes) that fits every layer's budget."""
    tm = min(_round_up(B, 8), _TM_MAX)
    while tm > 8:
        if all(_vmem_bytes(tm, _choose_tn(ind, outp, tm), ind) <= _VMEM_BUDGET
               for ind, outp in layer_dims):
            break
        tm = max(8, _round_up(tm // 2, 8))
    return tm


def _moe_layer_kernel(x_ref,        # (TM, in_dim)       VMEM f32
                      genres_ref,   # (TM, NUM_SLOTS)    VMEM int32
                      inv_ref,      # (TM, 1)            VMEM f32 (precomputed 1/denom)
                      w_ref,        # (1, in_dim, TN)    VMEM bf16 (one expert, N tile)
                      o_ref,        # (TM, TN)           VMEM (written once in epilogue)
                      acc_ref,      # (TM, TN)           VMEM f32 scratch accumulator
                      *, scale_result):
    g = pl.program_id(2)
    expert_id = g + 1   # expert 0 == masked/invalid slot, structurally skipped

    @pl.when(g == 0)
    def _init():
        acc_ref[...] = jnp.zeros_like(acc_ref)

    genres = genres_ref[...]                                           # (TM, 3)
    # How many of the 3 genre slots of each row select this expert (0..3).
    counts = jnp.sum((genres == expert_id).astype(jnp.float32),
                     axis=1, keepdims=True)                            # (TM, 1)

    if scale_result:
        # Scale the (TM, TN) result: avoids materializing a (TM, in_dim) temporary.
        acc_ref[...] += counts * jnp.dot(
            x_ref[...].astype(jnp.bfloat16), w_ref[0],
            preferred_element_type=jnp.float32)
    else:
        xs = (x_ref[...] * counts).astype(jnp.bfloat16)                # (TM, in_dim)
        acc_ref[...] += jnp.dot(xs, w_ref[0],
                                preferred_element_type=jnp.float32)

    @pl.when(g == pl.num_programs(2) - 1)
    def _finalize():
        res = acc_ref[...] * inv_ref[...]                              # no divide in kernel
        res = jnp.where(res >= 0, res, NEG_SLOPE * res)                # LeakyReLU
        o_ref[...] = res.astype(o_ref.dtype)                          # single lane-dense store


def _moe_layer(x, genres, inv_denom, w, *, tm):
    """One NewMoE layer on pre-padded inputs.

    x: (b_pad, in_dim) f32, genres: (b_pad, 3) int32, inv_denom: (b_pad, 1) f32,
    w: (G, in_dim, out_p) bf16 with out_p a multiple of 128 (from prepare_moe_params).
    Returns (b_pad, out_p) f32.
    """
    b_pad, in_dim = x.shape
    G, in_dim_w, out_p = w.shape
    assert in_dim == in_dim_w and b_pad % tm == 0 and out_p % 128 == 0

    if G <= 1:
        # Every genre index is 0 -> fully masked -> LeakyReLU(0) == 0.
        return jnp.zeros((b_pad, out_p), x.dtype)

    tn = _choose_tn(in_dim, out_p, tm)
    grid = (b_pad // tm, out_p // tn, G - 1)
    kernel = functools.partial(_moe_layer_kernel, scale_result=(tn <= in_dim))
    vmem_limit = int(max(_vmem_bytes(tm, tn, in_dim) + (4 << 20), 32 << 20))

    return pl.pallas_call(
        kernel,
        out_shape=jax.ShapeDtypeStruct((b_pad, out_p), x.dtype),
        grid_spec=pltpu.PrefetchScalarGridSpec(
            num_scalar_prefetch=0,
            grid=grid,
            in_specs=[
                pl.BlockSpec((tm, in_dim), lambda i, n, g: (i, 0)),
                pl.BlockSpec((tm, NUM_SLOTS), lambda i, n, g: (i, 0)),
                pl.BlockSpec((tm, 1), lambda i, n, g: (i, 0)),
                # expert g+1 (skip expert 0), N tile n; fetched once per (batch, N) tile
                pl.BlockSpec((1, in_dim, tn), lambda i, n, g: (g + 1, 0, n)),
            ],
            out_specs=pl.BlockSpec((tm, tn), lambda i, n, g: (i, n)),
            scratch_shapes=[pltpu.VMEM((tm, tn), jnp.float32)],
        ),
        compiler_params=pltpu.CompilerParams(
            dimension_semantics=("parallel", "parallel", "arbitrary"),
            vmem_limit_bytes=vmem_limit),
    )(x, genres, inv_denom, w)


def prepare_moe_params(weights):
    """One-time parameter prep (hoisted OUT of the forward path):
      * pad each layer's out_dim up to a multiple of 128 (lane-dense stores),
      * pad the NEXT layer's in_dim with zero rows to match -> no inter-layer slicing,
      * cast to bfloat16 (default MXU precision discards the extra f32 bits anyway,
        so this halves weight HBM/VMEM traffic at no additional compute error).
    Returns (prepared_weights, out_dims)."""
    prepared, out_dims = [], []
    prev_out_p = None
    for w in weights:
        G, in_dim, out_dim = w.shape
        in_p = in_dim if prev_out_p is None else prev_out_p
        assert in_p >= in_dim
        out_p = _round_up(out_dim, 128)
        wp = jnp.pad(w, ((0, 0), (0, in_p - in_dim), (0, out_p - out_dim)))
        prepared.append(wp.astype(jnp.bfloat16))
        out_dims.append(out_dim)
        prev_out_p = out_p
    return prepared, out_dims


def new_moe_forward(x, genres, prepared_weights, out_dims):
    """Full NewMoE forward. `prepared_weights`/`out_dims` come from prepare_moe_params."""
    B, in_dim = x.shape
    assert in_dim == prepared_weights[0].shape[1]

    # Hoisted, O(B)-sized per-forward prep (done once, not per layer):
    genres = genres.astype(jnp.int32)
    valid = jnp.sum((genres != 0).astype(jnp.float32), axis=1, keepdims=True)
    inv_denom = 1.0 / jnp.maximum(valid, 1e-9)               # matches clamp(min=1e-9)

    layer_dims = [(w.shape[1], w.shape[2]) for w in prepared_weights]
    tm = _choose_tm(B, layer_dims)
    b_pad = _round_up(B, tm)
    if b_pad != B:
        x = jnp.pad(x, ((0, b_pad - B), (0, 0)))
        genres = jnp.pad(genres, ((0, b_pad - B), (0, 0)))   # genre 0 -> masked rows
        inv_denom = jnp.pad(inv_denom, ((0, b_pad - B), (0, 0)))

    for w in prepared_weights:
        x = _moe_layer(x, genres, inv_denom, w, tm=tm)       # outputs chain unsliced
    return x[:B, :out_dims[-1]]


def new_moe_reference_np(x, genres, weights):
    """float64 numpy reference matching the PyTorch forward."""
    x = np.asarray(x, np.float64)
    genres = np.asarray(genres)
    for w in weights:
        w = np.asarray(w, np.float64)
        ew = w[genres]                                        # (B, 3, in, out)
        y = np.einsum('bd,bsdk->bsk', x, ew)                  # (B, 3, out)
        mask = (genres != 0)[..., None].astype(np.float64)    # (B, 3, 1)
        y = y * mask
        denom = np.clip(mask.sum(axis=1), 1e-9, None)         # (B, 1)
        new_x = y.sum(axis=1) / denom
        x = np.where(new_x >= 0, new_x, NEG_SLOPE * new_x)
    return x


if __name__ == "__main__":
    # Small, module-consistent shapes.
    batch = 8
    in_features = 32
    hidden_features = 32
    out_features = 32
    genre_num = 5
    layers = 2

    key = jax.random.PRNGKey(0)
    kx, kg, *kw = jax.random.split(key, 2 + layers)

    x = jax.random.normal(kx, (batch, in_features), dtype=jnp.float32)
    # genres in [0, genre_num); genre 0 acts as the "invalid / masked" slot.
    genres = jax.random.randint(kg, (batch, NUM_SLOTS), 0, genre_num, dtype=jnp.int32)

    weights = []
    for i in range(layers):
        in_dim = in_features if i == 0 else hidden_features
        out_dim = out_features if i == layers - 1 else hidden_features
        weights.append(jax.random.normal(kw[i], (genre_num, in_dim, out_dim),
                                         dtype=jnp.float32))

    # Parameter-setup-time prep (pad + bf16 cast) -- done once, outside the forward.
    prepared_weights, out_dims = prepare_moe_params(weights)

    out = new_moe_forward(x, genres, prepared_weights, out_dims)
    out = jax.block_until_ready(out)

    ref = new_moe_reference_np(x, genres, weights)
    out_np = np.asarray(out, np.float64)

    # bf16-streamed weights + default-precision MXU -> compare with a relative-L2
    # criterion against the float64 reference (loose enough for bf16-granularity
    # matmuls, tight enough to catch any semantic bug).
    rel_err = np.linalg.norm(out_np - ref) / max(np.linalg.norm(ref), 1e-30)
    assert out_np.shape == ref.shape
    assert rel_err < 3e-2, f"relative L2 error too large: {rel_err}"

    print("KERNEL_OK")
</pallas_src>

<mosaic_0001>
module attributes {stable_mosaic.version = 11 : i64} {
  func.func @_moe_layer_kernel(%arg0: i32, %arg1: i32, %arg2: i32, %arg3: memref<8x32xf32, #tpu.memory_space<vmem>>, %arg4: memref<8x3xi32, #tpu.memory_space<vmem>>, %arg5: memref<8x1xf32, #tpu.memory_space<vmem>>, %arg6: memref<1x32x128xbf16, #tpu.memory_space<vmem>>, %arg7: memref<8x128xf32, #tpu.memory_space<vmem>>, %arg8: memref<8x128xf32, #tpu.memory_space<vmem>>) attributes {dimension_semantics = [#tpu.dimension_semantics<parallel>, #tpu.dimension_semantics<parallel>, #tpu.dimension_semantics<arbitrary>], iteration_bounds = array<i64: 1, 1, 4>, scalar_prefetch = 0 : i64, scratch_operands = 1 : i64, tpu.core_type = #tpu.core_type<tc>, window_params = [{transform_indices = @transform_0, window_bounds = array<i64: 8, 32>}, {transform_indices = @transform_1, window_bounds = array<i64: 8, 3>}, {transform_indices = @transform_2, window_bounds = array<i64: 8, 1>}, {transform_indices = @transform_3, window_bounds = array<i64: 1, 32, 128>}, {transform_indices = @transform_4, window_bounds = array<i64: 8, 128>}]} {
    %c1_i32 = arith.constant 1 : i32
    %0 = arith.addi %arg2, %c1_i32 : i32
    %c0_i32 = arith.constant 0 : i32
    %1 = arith.cmpi eq, %arg2, %c0_i32 : i32
    %2 = arith.extui %1 : i1 to i32
    %c0_i32_0 = arith.constant 0 : i32
    %3 = arith.cmpi ne, %2, %c0_i32_0 : i32
    scf.if %3 {
      %cst_13 = arith.constant 0.000000e+00 : f32
      %24 = vector.broadcast %cst_13 : f32 to vector<8x128xf32>
      %c0_14 = arith.constant 0 : index
      %c0_15 = arith.constant 0 : index
      %25 = vector.load %arg8[%c0_14, %c0_15] : memref<8x128xf32, #tpu.memory_space<vmem>>, vector<8x128xf32>
      tpu.vector_store %arg8[%c0_14, %c0_15], %24 {strides = array<i32>} : memref<8x128xf32, #tpu.memory_space<vmem>>, vector<8x128xf32>,
    } else {
    }
    %c0 = arith.constant 0 : index
    %c0_1 = arith.constant 0 : index
    %4 = vector.load %arg4[%c0, %c0_1] : memref<8x3xi32, #tpu.memory_space<vmem>>, vector<8x3xi32>
    %5 = vector.broadcast %0 : i32 to vector<8x3xi32>
    %6 = arith.cmpi eq, %4, %5 : vector<8x3xi32>
    %7 = arith.extui %6 : vector<8x3xi1> to vector<8x3xi32>
    %8 = arith.sitofp %7 : vector<8x3xi32> to vector<8x3xf32>
    %cst = arith.constant dense<0.000000e+00> : vector<8xf32>
    %9 = vector.multi_reduction <add>, %8, %cst [1] : vector<8x3xf32> to vector<8xf32>
    %10 = vector.shape_cast %9 : vector<8xf32> to vector<8x1xf32>
    %c0_2 = arith.constant 0 : index
    %c0_3 = arith.constant 0 : index
    %11 = vector.load %arg3[%c0_2, %c0_3] : memref<8x32xf32, #tpu.memory_space<vmem>>, vector<8x32xf32>
    %12 = vector.broadcast %10 : vector<8x1xf32> to vector<8x32xf32>
    %13 = arith.mulf %11, %12 : vector<8x32xf32>
    %14 = arith.truncf %13 : vector<8x32xf32> to vector<8x32xbf16>
    %c0_4 = arith.constant 0 : index
    %c0_5 = arith.constant 0 : index
    %15 = vector.load %arg8[%c0_4, %c0_5] : memref<8x128xf32, #tpu.memory_space<vmem>>, vector<8x128xf32>
    %c0_6 = arith.constant 0 : index
    %c0_7 = arith.constant 0 : index
    %c0_8 = arith.constant 0 : index
    %16 = vector.load %arg6[%c0_6, %c0_7, %c0_8] : memref<1x32x128xbf16, #tpu.memory_space<vmem>>, vector<1x32x128xbf16>
    %17 = vector.shape_cast %16 : vector<1x32x128xbf16> to vector<32x128xbf16>
    %cst_9 = arith.constant dense<0.000000e+00> : vector<8x128xf32>
    %18 = tpu.matmul %14, %17, %cst_9 {dimension_numbers = #tpu.dot_dimension_numbers<[1], [0], [0], [1], [0, 0, 1, 1], [], []>} : vector<8x32xbf16>, vector<32x128xbf16>, vector<8x128xf32> -> vector<8x128xf32>
    %19 = arith.addf %15, %18 : vector<8x128xf32>
    %c0_10 = arith.constant 0 : index
    %c0_11 = arith.constant 0 : index
    %20 = vector.load %arg8[%c0_10, %c0_11] : memref<8x128xf32, #tpu.memory_space<vmem>>, vector<8x128xf32>
    tpu.vector_store %arg8[%c0_10, %c0_11], %19 {strides = array<i32>} : memref<8x128xf32, #tpu.memory_space<vmem>>, vector<8x128xf32>,
    %c3_i32 = arith.constant 3 : i32
    %21 = arith.cmpi eq, %arg2, %c3_i32 : i32
    %22 = arith.extui %21 : i1 to i32
    %c0_i32_12 = arith.constant 0 : i32
    %23 = arith.cmpi ne, %22, %c0_i32_12 : i32
    scf.if %23 {
      %c0_13 = arith.constant 0 : index
      %c0_14 = arith.constant 0 : index
      %24 = vector.load %arg8[%c0_13, %c0_14] : memref<8x128xf32, #tpu.memory_space<vmem>>, vector<8x128xf32>
      %c0_15 = arith.constant 0 : index
      %c0_16 = arith.constant 0 : index
      %25 = vector.load %arg5[%c0_15, %c0_16] : memref<8x1xf32, #tpu.memory_space<vmem>>, vector<8x1xf32>
      %26 = vector.broadcast %25 : vector<8x1xf32> to vector<8x128xf32>
      %27 = arith.mulf %24, %26 : vector<8x128xf32>
      %cst_17 = arith.constant 0.000000e+00 : f32
      %28 = vector.broadcast %cst_17 : f32 to vector<8x128xf32>
      %29 = arith.cmpf oge, %27, %28 : vector<8x128xf32>
      %cst_18 = arith.constant 0.00999999977 : f32
      %30 = vector.broadcast %cst_18 : f32 to vector<8x128xf32>
      %31 = arith.mulf %30, %27 : vector<8x128xf32>
      %32 = arith.select %29, %27, %31 : vector<8x128xi1>, vector<8x128xf32>
      %c0_19 = arith.constant 0 : index
      %c0_20 = arith.constant 0 : index
      %33 = vector.load %arg7[%c0_19, %c0_20] : memref<8x128xf32, #tpu.memory_space<vmem>>, vector<8x128xf32>
      tpu.vector_store %arg7[%c0_19, %c0_20], %32 {strides = array<i32>} : memref<8x128xf32, #tpu.memory_space<vmem>>, vector<8x128xf32>,
    } else {
    }
    return
  }
  func.func @transform_0(%arg0: i32, %arg1: i32, %arg2: i32) -> (i32, i32) {
    %c0_i32 = arith.constant 0 : i32
    %c0_i32_0 = arith.constant 0 : i32
    return %arg0, %c0_i32 : i32, i32
  }
  func.func @transform_1(%arg0: i32, %arg1: i32, %arg2: i32) -> (i32, i32) {
    %c0_i32 = arith.constant 0 : i32
    %c0_i32_0 = arith.constant 0 : i32
    return %arg0, %c0_i32 : i32, i32
  }
  func.func @transform_2(%arg0: i32, %arg1: i32, %arg2: i32) -> (i32, i32) {
    %c0_i32 = arith.constant 0 : i32
    %c0_i32_0 = arith.constant 0 : i32
    return %arg0, %c0_i32 : i32, i32
  }
  func.func @transform_3(%arg0: i32, %arg1: i32, %arg2: i32) -> (i32, i32, i32) {
    %c1_i32 = arith.constant 1 : i32
    %0 = arith.addi %arg2, %c1_i32 : i32
    %c0_i32 = arith.constant 0 : i32
    %c0_i32_0 = arith.constant 0 : i32
    return %0, %c0_i32, %arg1 : i32, i32, i32
  }
  func.func @transform_4(%arg0: i32, %arg1: i32, %arg2: i32) -> (i32, i32) {
    %c0_i32 = arith.constant 0 : i32
    return %arg0, %arg1 : i32, i32
  }
}

</mosaic_0001>

<llo_original>
// kernel: tpu_custom_call.1
$region0: #{tpu_custom_call.1}
  #allocation0 [shape = 'u32[]', space=smem, size = 0x4, offset = 0x4, fixed_abs, tag = 'smem constant byte address 0x4 - core index']
  #allocation1 [shape = 'u32[144,128]{1,0:T(1,128)}', space=vmem, size = 0x12000, scoped, tag = 'internal scratch']
  #allocation2 [shape = 'f32[8,128]{1,0:T(8,128)}', space=vmem, size = 0x1000, scoped, tag = 'scratch operand']
  %s0 = inlined_call_operand.vmem [shape: f32[8,32], index: 0, kind: input, shape index: {}]
  %s1 = inlined_call_operand.vmem [shape: s32[8,3], index: 1, kind: input, shape index: {}]
  %s2 = inlined_call_operand.vmem [shape: f32[8,1], index: 2, kind: input, shape index: {}]
  %s3 = inlined_call_operand.hbm [shape: bf16[5,32,128], index: 3, kind: input, shape index: {}]
  %s4 = inlined_call_operand.hbm [shape: f32[8,128], index: 4, kind: output, shape index: {}]
  %s5 = sld [smem:[#allocation0]]
  $region61: #{tpu_custom_call.1} parent=0
    _
  %s7 = ssub.s32 1, %s5
  %s8 = scalar_select 0, %s7, %s5
  $region1: #{tpu_custom_call.1} parent=0
    #allocation3 [shape = 'u8[16384]{0}', space=vmem, size = 0x4000, scoped, tag = 'input window, operand 3']
    #allocation4 [shape = 's32[2]{0}', space=sflag, size = 0x8, scoped, tag = 'scoped memory for tpu_custom_call.1']
    #allocation5 [shape = 's32[2]{0}', space=sflag, size = 0x8, scoped, tag = 'scoped memory for tpu_custom_call.1']
    #allocation6 [shape = 'u8[4096]{0}', space=vmem, size = 0x1000, scoped, tag = 'output window, operand 0, single buffered']
    %9 = vsyncpa [#allocation4], 0
    %s10 = scalar_lea.sflag [#allocation4], 1
    %11 = vsyncpa %s10, 0
    %12 = vsyncpa [#allocation5], 0
    loop: start=0, step=1, limit=6
    $region2: #{tpu_custom_call.1} parent=1 // loop_pre_header
      _
    $region3: #{tpu_custom_call.1} parent=1 // loop_header
      %s14 = sphi 0, %s18
      %p15 = scmp.ge.s32.totalorder %s14, 6
      %s21 = sphi 0, %s40
      %s22 = sphi 0, %s36
      %s23 = sphi 0, %s32
      %s24 = sphi 0, %s21
      %s25 = sphi 0, %s22
      %s26 = sphi 0, %s23
      %s27 = sphi 0, %s24
      %s28 = sphi 0, %s25
      %s29 = sphi 0, %s26
      %s43 = sphi 0, %s45
      %s46 = sphi 0, %s43
      %s47 = sphi 0, %s46
      %s63 = sphi 0, %s47
      %s69 = sphi 0, %s71
      %s72 = sphi 0, %s69
      %s73 = sphi 0, %s72
      %s89 = sphi 0, %s73
      %s95 = sphi 0, %s97
      %s98 = sphi 0, %s95
      %s99 = sphi 0, %s98
      %s115 = sphi 0, %s99
      %s125 = sphi 0, %s127
      %s128 = sphi 0, %s125
      %s129 = sphi 0, %s128
      %s145 = sphi 0, %s129
      %s153 = sphi 0, %s155
      %s156 = sphi 0, %s153
      %s157 = sphi 0, %s156
      %s173 = sphi 0, %s157
    $region4: #{tpu_custom_call.1} parent=1 // loop_header_branch
      %17 = sbr.rel (%p15) target = $region8
    $region5: #{tpu_custom_call.1} parent=1 // loop_body
      %s19 = ssub.s32 %s14, 1
      %s20 = ssub.s32 %s14, 2
      %s30 = sadd.s32 1, %s23
      %p31 = scmp.ge.s32.totalorder %s30, 4
      %s32 = scalar_select %p31, 0, %s30
      %s33 = sadd.s32 1, %s22
      %s34 = scalar_select %p31, %s33, %s22
      %p35 = scmp.ge.s32.totalorder %s34, 1
      %s36 = scalar_select %p35, 0, %s34
      %s37 = sadd.s32 1, %s21
      %s38 = scalar_select %p35, %s37, %s21
      %p39 = scmp.ge.s32.totalorder %s38, 1
      %s40 = scalar_select %p39, 0, %s38
      %s41 = ssub.s32 %s21, %s40
      %p42 = scmp.eq.s32.totalorder %s41, 0
      %s44 = sadd.s32 %s43, 1
      %s45 = scalar_select %p42, %s43, %s44
      %p48 = pneg %p42
      %p49 = scmp.eq.s32.totalorder %s14, 3
      %p50 = por %p48, %p49
      %p51 = scmp.ne.s32.totalorder %s43, %s46
      %p52 = scmp.eq.s32.totalorder %s14, 0
      %p53 = por %p51, %p52
      %p54 = scmp.ne.s32.totalorder %s43, %s46
      %p55 = scmp.eq.s32.totalorder %s19, 3
      %p56 = por %p54, %p55
      %p57 = scmp.ne.s32.totalorder %s46, %s47
      %p58 = scmp.eq.s32.totalorder %s19, 0
      %p59 = por %p57, %p58
      %p60 = scmp.ne.s32.totalorder %s46, %s47
      %p61 = scmp.eq.s32.totalorder %s20, 3
      %p62 = por %p60, %p61
      %p64 = scmp.ne.s32.totalorder %s47, %s63
      %p65 = scmp.eq.s32.totalorder %s20, 0
      %p66 = por %p64, %p65
      %s67 = ssub.s32 %s21, %s40
      %p68 = scmp.eq.s32.totalorder %s67, 0
      %s70 = sadd.s32 %s69, 1
      %s71 = scalar_select %p68, %s69, %s70
      %p74 = pneg %p68
      %p75 = scmp.eq.s32.totalorder %s14, 3
      %p76 = por %p74, %p75
      %p77 = scmp.ne.s32.totalorder %s69, %s72
      %p78 = scmp.eq.s32.totalorder %s14, 0
      %p79 = por %p77, %p78
      %p80 = scmp.ne.s32.totalorder %s69, %s72
      %p81 = scmp.eq.s32.totalorder %s19, 3
      %p82 = por %p80, %p81
      %p83 = scmp.ne.s32.totalorder %s72, %s73
      %p84 = scmp.eq.s32.totalorder %s19, 0
      %p85 = por %p83, %p84
      %p86 = scmp.ne.s32.totalorder %s72, %s73
      %p87 = scmp.eq.s32.totalorder %s20, 3
      %p88 = por %p86, %p87
      %p90 = scmp.ne.s32.totalorder %s73, %s89
      %p91 = scmp.eq.s32.totalorder %s20, 0
      %p92 = por %p90, %p91
      %s93 = ssub.s32 %s21, %s40
      %p94 = scmp.eq.s32.totalorder %s93, 0
      %s96 = sadd.s32 %s95, 1
      %s97 = scalar_select %p94, %s95, %s96
      %p100 = pneg %p94
      %p101 = scmp.eq.s32.totalorder %s14, 3
      %p102 = por %p100, %p101
      %p103 = scmp.ne.s32.totalorder %s95, %s98
      %p104 = scmp.eq.s32.totalorder %s14, 0
      %p105 = por %p103, %p104
      %p106 = scmp.ne.s32.totalorder %s95, %s98
      %p107 = scmp.eq.s32.totalorder %s19, 3
      %p108 = por %p106, %p107
      %p109 = scmp.ne.s32.totalorder %s98, %s99
      %p110 = scmp.eq.s32.totalorder %s19, 0
      %p111 = por %p109, %p110
      %p112 = scmp.ne.s32.totalorder %s98, %s99
      %p113 = scmp.eq.s32.totalorder %s20, 3
      %p114 = por %p112, %p113
      %p116 = scmp.ne.s32.totalorder %s99, %s115
      %p117 = scmp.eq.s32.totalorder %s20, 0
      %p118 = por %p116, %p117
      %s119 = sadd.s32 %s23, 1
      %s120 = sadd.s32 %s32, 1
      %s121 = ssub.s32 %s119, %s120
      %s122 = ssub.s32 %s22, %s36
      %s123 = sor.u32 %s121, %s122
      %p124 = scmp.eq.s32.totalorder %s123, 0
      %s126 = sadd.s32 %s125, 1
      %s127 = scalar_select %p124, %s125, %s126
      %p130 = pneg %p124
      %p131 = scmp.eq.s32.totalorder %s14, 3
      %p132 = por %p130, %p131
      %p133 = scmp.ne.s32.totalorder %s125, %s128
      %p134 = scmp.eq.s32.totalorder %s14, 0
      %p135 = por %p133, %p134
      %p136 = scmp.ne.s32.totalorder %s125, %s128
      %p137 = scmp.eq.s32.totalorder %s19, 3
      %p138 = por %p136, %p137
      %p139 = scmp.ne.s32.totalorder %s128, %s129
      %p140 = scmp.eq.s32.totalorder %s19, 0
      %p141 = por %p139, %p140
      %p142 = scmp.ne.s32.totalorder %s128, %s129
      %p143 = scmp.eq.s32.totalorder %s20, 3
      %p144 = por %p142, %p143
      %p146 = scmp.ne.s32.totalorder %s129, %s145
      %p147 = scmp.eq.s32.totalorder %s20, 0
      %p148 = por %p146, %p147
      %s149 = ssub.s32 %s21, %s40
      %s150 = ssub.s32 %s22, %s36
      %s151 = sor.u32 %s149, %s150
      %p152 = scmp.eq.s32.totalorder %s151, 0
      %s154 = sadd.s32 %s153, 1
      %s155 = scalar_select %p152, %s153, %s154
      %p158 = pneg %p152
      %p159 = scmp.eq.s32.totalorder %s14, 3
      %p160 = por %p158, %p159
      %p161 = scmp.ne.s32.totalorder %s153, %s156
      %p162 = scmp.eq.s32.totalorder %s14, 0
      %p163 = por %p161, %p162
      %p164 = scmp.ne.s32.totalorder %s153, %s156
      %p165 = scmp.eq.s32.totalorder %s19, 3
      %p166 = por %p164, %p165
      %p167 = scmp.ne.s32.totalorder %s156, %s157
      %p168 = scmp.eq.s32.totalorder %s19, 0
      %p169 = por %p167, %p168
      %p170 = scmp.ne.s32.totalorder %s156, %s157
      %p171 = scmp.eq.s32.totalorder %s20, 3
      %p172 = por %p170, %p171
      %p174 = scmp.ne.s32.totalorder %s157, %s173
      %p175 = scmp.eq.s32.totalorder %s20, 0
      %p176 = por %p174, %p175
      %p177 = scmp.le.s32.totalorder 1, %s14
      %p178 = scmp.lt.s32.totalorder %s14, 5
      %p179 = pnand %p177, %p178
      %p180 = pneg %p179
      // Predicated region
      $region9: #{tpu_custom_call.1} parent=5 // pred_check
        _
      $region10: #{tpu_custom_call.1} parent=5 // pred_check_branch
        %182 = sbr.rel (%p179) target = $region12
      $region11: #{tpu_custom_call.1} parent=5 // pred_region
        %s183 = ssub.s32 %s14, 1
        // Predicated region
        $region13: #{tpu_custom_call.1} parent=11 // pred_check
          %p184 = pneg %p59
        $region14: #{tpu_custom_call.1} parent=11 // pred_check_branch
          %186 = sbr.rel (%p184) target = $region16
        $region15: #{tpu_custom_call.1} parent=11 // pred_region
          %p187 = scmp.lt.s32.totalorder %s24, 0
          %s188 = scalar_select %p187, %s24, 0
          %s189 = smul.addr %s188, 8
          %s190 = scalar_lea.vmem %s0, %s189
        $region16: #{tpu_custom_call.1} parent=11 // pred_fallthru
          _
        // Predicated region
        $region17: #{tpu_custom_call.1} parent=11 // pred_check
          %p191 = pneg %p85
        $region18: #{tpu_custom_call.1} parent=11 // pred_check_branch
          %193 = sbr.rel (%p191) target = $region20
        $region19: #{tpu_custom_call.1} parent=11 // pred_region
          %p194 = scmp.lt.s32.totalorder %s24, 0
          %s195 = scalar_select %p194, %s24, 0
          %s196 = smul.addr %s195, 8
          %s197 = scalar_lea.vmem %s1, %s196
        $region20: #{tpu_custom_call.1} parent=11 // pred_fallthru
          _
        // Predicated region
        $region21: #{tpu_custom_call.1} parent=11 // pred_check
          %p198 = pneg %p111
        $region22: #{tpu_custom_call.1} parent=11 // pred_check_branch
          %200 = sbr.rel (%p198) target = $region24
        $region23: #{tpu_custom_call.1} parent=11 // pred_region
          %p201 = scmp.lt.s32.totalorder %s24, 0
          %s202 = scalar_select %p201, %s24, 0
          %s203 = smul.addr %s202, 8
          %s204 = scalar_lea.vmem %s2, %s203
        $region24: #{tpu_custom_call.1} parent=11 // pred_fallthru
          _
      $region12: #{tpu_custom_call.1} parent=5 // pred_fallthru
        _
      %p205 = scmp.lt.s32.totalorder %s14, 4
      // Predicated region
      $region25: #{tpu_custom_call.1} parent=5 // pred_check
        %p206 = pneg %p205
      $region26: #{tpu_custom_call.1} parent=5 // pred_check_branch
        %208 = sbr.rel (%p206) target = $region28
      $region27: #{tpu_custom_call.1} parent=5 // pred_region
        // Predicated region
        $region29: #{tpu_custom_call.1} parent=27 // pred_check
          %p209 = pneg %p135
        $region30: #{tpu_custom_call.1} parent=27 // pred_check_branch
          %211 = sbr.rel (%p209) target = $region32
        $region31: #{tpu_custom_call.1} parent=27 // pred_region
          %s212 = sand.u32 %s125, 1
          %s213 = scalar_lea.sflag [#allocation4], %s212
          %s214 = sand.u32 %s125, 1
          %s215 = smul.addr %s214, 16
          %s216 = scalar_lea.vmem [#allocation3], %s215
          %s217 = sadd.s32 %s23, 1
          %s219 = ssub.s32 256, 256
          %220 = vsyncadd %s213, %s219
          %s221 = smul.addr %s217, 4
          %s222 = sadd.s32 %s22, %s221
          %s223 = smul.addr %s222, 64
          %s224 = scalar_lea.hbm %s3, %s223
          %s225 = sshll.u32 %s216, 4
          %s226 = int_to_ptr.vmem [resolvable:$true] %s225
          %231 = dma.hbm_to_vmem [thread:$0]  %s224, 256, %s226, %s213, 64, 64, 4
        $region32: #{tpu_custom_call.1} parent=27 // pred_fallthru
          _
      $region28: #{tpu_custom_call.1} parent=5 // pred_fallthru
        _
      %p232 = scmp.le.s32.totalorder 1, %s14
      %p233 = scmp.lt.s32.totalorder %s14, 5
      %p234 = pnand %p232, %p233
      %p235 = pneg %p234
      // Predicated region
      $region33: #{tpu_custom_call.1} parent=5 // pred_check
        _
      $region34: #{tpu_custom_call.1} parent=5 // pred_check_branch
        %237 = sbr.rel (%p234) target = $region36
      $region35: #{tpu_custom_call.1} parent=5 // pred_region
        %s238 = ssub.s32 %s14, 1
        %s239 = sand.u32 %s128, 1
        %s240 = scalar_lea.sflag [#allocation4], %s239
        %s241 = sand.u32 %s128, 1
        %s242 = smul.addr %s241, 16
        %s243 = scalar_lea.vmem [#allocation3], %s242
        // Predicated region
        $region37: #{tpu_custom_call.1} parent=35 // pred_check
          %p244 = pneg %p141
        $region38: #{tpu_custom_call.1} parent=35 // pred_check_branch
          %246 = sbr.rel (%p244) target = $region40
        $region39: #{tpu_custom_call.1} parent=35 // pred_region
          %247 = dma.done %s240, 256
        $region40: #{tpu_custom_call.1} parent=35 // pred_fallthru
          _
        %p248 = scmp.lt.s32.totalorder %s24, 0
        %s249 = scalar_select %p248, %s24, 0
        %s250 = smul.addr %s249, 8
        %s251 = scalar_lea.vmem %s0, %s250
        %p252 = pneg %p59
        %p253 = pneg %p56
        %p254 = scmp.lt.s32.totalorder %s24, 0
        %s255 = scalar_select %p254, %s24, 0
        %s256 = smul.addr %s255, 8
        %s257 = scalar_lea.vmem %s1, %s256
        %p258 = pneg %p85
        %p259 = pneg %p82
        %p260 = scmp.lt.s32.totalorder %s24, 0
        %s261 = scalar_select %p260, %s24, 0
        %s262 = smul.addr %s261, 8
        %s263 = scalar_lea.vmem %s2, %s262
        %p264 = pneg %p111
        %p265 = pneg %p108
        %s266 = sand.u32 %s128, 1
        %s267 = scalar_lea.sflag [#allocation4], %s266
        %s268 = sand.u32 %s128, 1
        %s269 = smul.addr %s268, 16
        %s270 = scalar_lea.vmem [#allocation3], %s269
        %p271 = pneg %p141
        %p272 = pneg %p138
        %p273 = pneg %p169
        %p274 = pneg %p166
        %p275 = scmp.lt.s32.totalorder %s24, 0
        %s276 = scalar_select %p275, %s24, 0
        %s277 = smul.addr %s276, 8
        %s278 = scalar_lea.vmem %s0, %s277
        %p279 = scmp.lt.s32.totalorder %s24, 0
        %s280 = scalar_select %p279, %s24, 0
        %s281 = smul.addr %s280, 8
        %s282 = scalar_lea.vmem %s1, %s281
        %p283 = scmp.lt.s32.totalorder %s24, 0
        %s284 = scalar_select %p283, %s24, 0
        %s285 = smul.addr %s284, 8
        %s286 = scalar_lea.vmem %s2, %s285
        %s287 = sadd.s32 %s26, 1
        %s289 = sadd.s32 %s26, 1
        %p290 = scmp.eq.s32.totalorder %s26, 0
        // Predicated region
        $region41: #{tpu_custom_call.1} parent=35 // pred_check
          %p291 = pneg %p290
        $region42: #{tpu_custom_call.1} parent=35 // pred_check_branch
          %293 = sbr.rel (%p291) target = $region44
        $region43: #{tpu_custom_call.1} parent=35 // pred_region
          %294 = vst [vmem:[#allocation2] sm:$0xff] 0.0
        $region44: #{tpu_custom_call.1} parent=35 // pred_fallthru
          _
        %v295 = vld [vmem:[%s282] sm:$0xff]
        %v296 = vstv %s289
        %vm297 = vcmp.eq.s32.totalorder %v295, %v296
        %v298 = vsel %vm297, 1, 0
        %v299 = vcvt.s32.f32 %v298
        %vm300 = vcmask 23552
        %v301 = vsel %vm300, %v299, 0.0
        %302 = vadd.xlane.f32.xlu0 %v301
        %v303 = vpop.xlane.xlu0 %302
        %v304 = vld [vmem:[%s278] sm:$0xff]
        %v305 = vmul.f32 %v304, %v303
        %v306 = vpack.c.bf16 %v305, %v305
        %v307 = vld [vmem:[#allocation2] sm:$0xff]
        %v308 = vld [vmem:[%s243] sm:$0xf]
        %v309 = vld [vmem:[%s243 + $0x4] sm:$0xf]
        %v310 = vld [vmem:[%s243 + $0x8] sm:$0xf]
        %v311 = vld [vmem:[%s243 + $0xc] sm:$0xf]
        %v316 = vunpack.c.l.b16 %v308
        %v317 = vunpack.c.l.b16 %v309
        %v318 = vunpack.c.l.b16 %v310
        %v319 = vunpack.c.l.b16 %v311
        %v320 = vpack.c.b16 %v317, %v316
        %v321 = vpack.c.b16 %v319, %v318
        %vm324 = vcmask 261120
        %v326 = vsel %vm324, %v306, 0
        %328 = vmatprep.subr.bf16.mxu0 0
        %329 = vmatpush1.bf16.msra.mxu0 %v320
        %330 = vmatprep.subr.bf16.mxu0 0
        %331 = vmatpush1.bf16.msra.mxu0 %v321
        %332 = vmatprep.subr.bf16.mxu0 0
        %333 = vmatpush1.bf16.msra.mxu0 0
        %334 = vmatprep.subr.bf16.mxu0 0
        %335 = vmatpush1.bf16.msra.mxu0 0
        %336 = vmatprep.subr.bf16.mxu0 0
        %337 = vmatpush1.bf16.msra.mxu0 0
        %338 = vmatprep.subr.bf16.mxu0 0
        %339 = vmatpush1.bf16.msra.mxu0 0
        %340 = vmatprep.subr.bf16.mxu0 0
        %341 = vmatpush1.bf16.msra.mxu0 0
        %342 = vmatprep.subr.bf16.mxu0 0
        %343 = vmatpush1.bf16.msra.mxu0 0
        %344 = vmatprep.subr.bf16.mxu0 0
        %345 = vmatpush1.bf16.msra.mxu0 0
        %346 = vmatprep.subr.bf16.mxu0 0
        %347 = vmatpush1.bf16.msra.mxu0 0
        %348 = vmatprep.subr.bf16.mxu0 0
        %349 = vmatpush1.bf16.msra.mxu0 0
        %350 = vmatprep.subr.bf16.mxu0 0
        %351 = vmatpush1.bf16.msra.mxu0 0
        %352 = vmatprep.subr.bf16.mxu0 0
        %353 = vmatpush1.bf16.msra.mxu0 0
        %354 = vmatprep.subr.bf16.mxu0 0
        %355 = vmatpush1.bf16.msra.mxu0 0
        %356 = vmatprep.subr.bf16.mxu0 0
        %357 = vmatpush1.bf16.msra.mxu0 0
        %358 = vmatprep.subr.bf16.mxu0 0
        %359 = vmatpush1.bf16.msra.mxu0 0
        %360 = vmatprep.mubr.bf16.mxu0 0
        %361 = vmatmul.mubr.bf16.gmra.mrb[0].mxu0 %v326
        %v362 = vpop.f32.mrb[0].mxu0
        %v363 = vadd.f32 0.0, %v362
        %v364 = vpop.f32.mrb[0].mxu0
        %v365 = vpop.f32.mrb[0].mxu0
        %v366 = vpop.f32.mrb[0].mxu0
        %367 = vdwg.mxu0
        %v368 = vadd.f32 %v307, %v363
        %369 = vst [vmem:[#allocation2] sm:$0xff] %v368
        %p370 = scmp.eq.s32.totalorder %s26, 3
        // Predicated region
        $region45: #{tpu_custom_call.1} parent=35 // pred_check
          %p371 = pneg %p370
        $region46: #{tpu_custom_call.1} parent=35 // pred_check_branch
          %373 = sbr.rel (%p371) target = $region48
        $region47: #{tpu_custom_call.1} parent=35 // pred_region
          %v374 = vld [vmem:[#allocation2] sm:$0xff]
          %v375 = vld [vmem:[%s286] sm:$0xff]
          %377 = vset.pattern.permute.xlu0 0
          %378 = vperm.xlu0 %377, %v375
          %v379 = vpop.permute.xlu0 %378
          %v381 = vmul.f32 %v374, %v379
          %vm382 = vcmp.ge.f32.partialorder %v381, 0.0
          %v383 = vmul.f32 %v381, 0.01
          %v384 = vsel %vm382, %v381, %v383
          %385 = vst [vmem:[#allocation6] sm:$0xff] %v384
        $region48: #{tpu_custom_call.1} parent=35 // pred_fallthru
          _
        // Predicated region
        $region49: #{tpu_custom_call.1} parent=35 // pred_check
          %p386 = pneg %p166
        $region50: #{tpu_custom_call.1} parent=35 // pred_check_branch
          %388 = sbr.rel (%p386) target = $region52
        $region51: #{tpu_custom_call.1} parent=35 // pred_region
          %s390 = ssub.s32 128, 128
          %391 = vsyncadd [#allocation5], %s390
          %s392 = sadd.s32 %s25, %s24
          %s393 = smul.addr %s392, 128
          %s394 = scalar_lea.hbm %s4, %s393
          %s396 = sshll.u32 [#allocation6], 4
          %s397 = int_to_ptr.vmem [resolvable:$true] %s396
          %399 = dma.vmem_to_hbm [thread:$0]  %s397, 128, %s394, [#allocation5]
        $region52: #{tpu_custom_call.1} parent=35 // pred_fallthru
          _
        // Predicated region
        $region53: #{tpu_custom_call.1} parent=35 // pred_check
          %p400 = pneg %p166
        $region54: #{tpu_custom_call.1} parent=35 // pred_check_branch
          %402 = sbr.rel (%p400) target = $region56
        $region55: #{tpu_custom_call.1} parent=35 // pred_region
          %403 = dma.done [#allocation5], 128
        $region56: #{tpu_custom_call.1} parent=35 // pred_fallthru
          _
      $region36: #{tpu_custom_call.1} parent=5 // pred_fallthru
        _
      %p404 = scmp.le.s32.totalorder 2, %s14
      // Predicated region
      $region57: #{tpu_custom_call.1} parent=5 // pred_check
        %p405 = pneg %p404
      $region58: #{tpu_custom_call.1} parent=5 // pred_check_branch
        %407 = sbr.rel (%p405) target = $region60
      $region59: #{tpu_custom_call.1} parent=5 // pred_region
        %s408 = ssub.s32 %s14, 2
      $region60: #{tpu_custom_call.1} parent=5 // pred_fallthru
        _
    $region6: #{tpu_custom_call.1} parent=1 // loop_footer
      %s18 = sadd.s32 1, %s14
    $region7: #{tpu_custom_call.1} parent=1 // loop_footer_branch
      %13 = sbr.rel target = $region3
    $region8: #{tpu_custom_call.1} parent=1 // loop_exit
      _
    %409 = vsyncpa [#allocation4], 1
    %s410 = scalar_lea.sflag [#allocation4], 1
    %411 = vsyncpa %s410, 1
    %412 = vsyncpa [#allocation5], 1
    %s413 = scalar_lea.sflag [#allocation5], 1
    %414 = vsyncpa %s413, 1

</llo_original>
